<compile_context>
chip_gen: v5e
topology: v5e:2x2
jax: 0.10.0
libtpu: 0.0.40
codegen_flags: <defaults>
</compile_context>

<pallas_src>
import functools
import math

import jax
import jax.numpy as jnp
from jax.experimental import pallas as pl
from jax.experimental.pallas import tpu as pltpu


def _from_rgb_kernel(x_ref, w_ref, b_ref, o_ref, *, c, alpha):
    # x_ref: (bn, in_c, T)   w_ref: (out_c, in_c)   b_ref: (out_c, 1)   o_ref: (bn, out_c, T)
    w = w_ref[...].astype(jnp.float32) * c        # fold equalized-lr scale into tiny weight tile
    b = b_ref[...].astype(jnp.float32)            # (out_c, 1)

    bn = x_ref.shape[0]                           # static block dims
    in_c = x_ref.shape[1]

    for bi in range(bn):                          # small compile-time unroll (bn <= 8)
        x = x_ref[bi].astype(jnp.float32)         # (in_c, T)
        # Channel contraction as unrolled broadcast multiply-adds on the VPU. in_c is the
        # image channel count (1/3/4) for fromRGB, so this is 1-4 MACs per output element;
        # it avoids a K=3 MXU matmul that would waste 125/128 of the systolic array and
        # keeps the kernel DMA-bound.
        acc = w[:, 0:1] * x[0:1, :]               # (out_c, T)
        for i in range(1, in_c):
            acc = acc + w[:, i:i + 1] * x[i:i + 1, :]
        y = acc + b                               # lane-broadcast bias
        o_ref[bi] = jnp.where(y >= 0, y, alpha * y).astype(o_ref.dtype)   # LeakyReLU


def _pick_tiles(n, hw, c_in, c_out, target_bytes=2 * 1024 * 1024, max_batch_unroll=8):
    """Choose (batch_tile, spatial_tile) so one in+out block stays ~<= target_bytes."""
    bytes_per_lane = 4 * (c_in + c_out)

    if hw % 128 == 0:
        max_lanes = max(128, target_bytes // bytes_per_lane)
        tile = None
        t = 128
        while t <= hw:
            if hw % t == 0:
                if t <= max_lanes:
                    tile = t                       # keep growing while under budget
                elif tile is None:
                    tile = t                       # smallest legal divisor if all bust budget
            t += 128
        tile = hw if tile is None else tile
    else:
        tile = hw                                  # full-extent last dim (legal even if <128)

    bn = 1
    if tile == hw:
        # Whole spatial extent fits in one block: pack several batch images per grid step
        # so tiny-resolution fromRGB stages amortize per-step overhead.
        budget = max(1, target_bytes // max(1, hw * bytes_per_lane))
        cap = max(1, min(n, max_batch_unroll, budget))
        for d in range(cap, 0, -1):
            if n % d == 0:
                bn = d
                break
    return bn, tile


def pg_from_rgb(x, weight, bias, *, alpha=0.2, gain=math.sqrt(2.0)):
    """x: (N, in_c, H, W); weight: (out_c, in_c, 1, 1); bias: (1, out_c, 1, 1)."""
    N, c_in, H, W = x.shape
    c_out = weight.shape[0]
    fan_in = c_in * weight.shape[2] * weight.shape[3]
    c = gain / math.sqrt(fan_in)

    hw = H * W
    x2 = x.reshape(N, c_in, hw)                    # lane-dense last axis (free reshape)
    w2 = weight.reshape(c_out, c_in)
    b2 = bias.reshape(c_out, 1)

    bn, tile = _pick_tiles(N, hw, c_in, c_out)
    grid = (N // bn, hw // tile)

    kernel = functools.partial(_from_rgb_kernel, c=c, alpha=alpha)
    out = pl.pallas_call(
        kernel,
        out_shape=jax.ShapeDtypeStruct((N, c_out, hw), x.dtype),
        grid=grid,
        in_specs=[
            pl.BlockSpec((bn, c_in, tile), lambda n, s: (n, 0, s)),
            pl.BlockSpec((c_out, c_in), lambda n, s: (0, 0)),
            pl.BlockSpec((c_out, 1), lambda n, s: (0, 0)),
        ],
        out_specs=pl.BlockSpec((bn, c_out, tile), lambda n, s: (n, 0, s)),
        compiler_params=pltpu.CompilerParams(
            dimension_semantics=("parallel", "parallel"),
        ),
    )(x2, w2, b2)
    return out.reshape(N, c_out, H, W)


def _reference(x, weight, bias, alpha=0.2, gain=math.sqrt(2.0)):
    c_in = x.shape[1]
    fan_in = c_in * weight.shape[2] * weight.shape[3]
    c = gain / math.sqrt(fan_in)
    w2 = weight.reshape(weight.shape[0], c_in).astype(jnp.float32)
    y = jnp.einsum("oi,nihw->nohw", w2, x.astype(jnp.float32) * c)
    y = y + bias.reshape(1, -1, 1, 1).astype(jnp.float32)
    return jnp.where(y >= 0, y, alpha * y).astype(x.dtype)


if __name__ == "__main__":
    key = jax.random.PRNGKey(0)
    k_x, k_w = jax.random.split(key)

    # Small fromRGB block: batch=2, 3 image channels -> 32 feature channels, 16x16 spatial.
    N, img_ch, out_ch, S = 2, 3, 32, 16
    x = jax.random.normal(k_x, (N, img_ch, S, S), dtype=jnp.float32)
    weight = jax.random.normal(k_w, (out_ch, img_ch, 1, 1), dtype=jnp.float32)  # normal_(w, 0, 1)
    bias = jnp.zeros((1, out_ch, 1, 1), dtype=jnp.float32)                      # PG_bias init zeros

    out = pg_from_rgb(x, weight, bias, alpha=0.2)
    out = jax.block_until_ready(out)

    ref = _reference(x, weight, bias, alpha=0.2)
    assert out.shape == (N, out_ch, S, S)
    assert jnp.allclose(out, ref, atol=1e-5, rtol=1e-5), "mismatch vs reference"

    # TODO(synk): PGfromRGB.save() (torch.save file I/O) is not a forward-pass op; not translated.
    print("KERNEL_OK")
</pallas_src>

<mosaic_0001>
module attributes {stable_mosaic.version = 11 : i64} {
  func.func @_from_rgb_kernel(%arg0: i32, %arg1: i32, %arg2: memref<2x3x256xf32, #tpu.memory_space<vmem>>, %arg3: memref<32x3xf32, #tpu.memory_space<vmem>>, %arg4: memref<32x1xf32, #tpu.memory_space<vmem>>, %arg5: memref<2x32x256xf32, #tpu.memory_space<vmem>>) attributes {dimension_semantics = [#tpu.dimension_semantics<parallel>, #tpu.dimension_semantics<parallel>], iteration_bounds = array<i64: 1, 1>, scalar_prefetch = 0 : i64, scratch_operands = 0 : i64, tpu.core_type = #tpu.core_type<tc>, window_params = [{transform_indices = @transform_0, window_bounds = array<i64: 2, 3, 256>}, {pipeline_mode = #tpu.pipeline_mode<synchronous>, transform_indices = @transform_1, window_bounds = array<i64: 32, 3>}, {pipeline_mode = #tpu.pipeline_mode<synchronous>, transform_indices = @transform_2, window_bounds = array<i64: 32, 1>}, {transform_indices = @transform_3, window_bounds = array<i64: 2, 32, 256>}]} {
    %c0 = arith.constant 0 : index
    %c0_0 = arith.constant 0 : index
    %0 = vector.load %arg3[%c0, %c0_0] : memref<32x3xf32, #tpu.memory_space<vmem>>, vector<32x3xf32>
    %cst = arith.constant 0.816496611 : f32
    %1 = vector.broadcast %cst : f32 to vector<32x3xf32>
    %2 = arith.mulf %0, %1 : vector<32x3xf32>
    %c0_1 = arith.constant 0 : index
    %c0_2 = arith.constant 0 : index
    %3 = vector.load %arg4[%c0_1, %c0_2] : memref<32x1xf32, #tpu.memory_space<vmem>>, vector<32x1xf32>
    %c0_3 = arith.constant 0 : index
    %c0_4 = arith.constant 0 : index
    %c0_5 = arith.constant 0 : index
    %4 = vector.load %arg2[%c0_3, %c0_4, %c0_5] : memref<2x3x256xf32, #tpu.memory_space<vmem>>, vector<1x3x256xf32>
    %5 = vector.shape_cast %4 : vector<1x3x256xf32> to vector<3x256xf32>
    %6 = vector.extract_strided_slice %2 {offsets = [0, 0], sizes = [32, 1], strides = [1, 1]} : vector<32x3xf32> to vector<32x1xf32>
    %7 = vector.extract_strided_slice %5 {offsets = [0, 0], sizes = [1, 256], strides = [1, 1]} : vector<3x256xf32> to vector<1x256xf32>
    %8 = vector.broadcast %6 : vector<32x1xf32> to vector<32x256xf32>
    %9 = vector.broadcast %7 : vector<1x256xf32> to vector<32x256xf32>
    %10 = arith.mulf %8, %9 : vector<32x256xf32>
    %11 = vector.extract_strided_slice %2 {offsets = [0, 1], sizes = [32, 1], strides = [1, 1]} : vector<32x3xf32> to vector<32x1xf32>
    %12 = vector.extract_strided_slice %5 {offsets = [1, 0], sizes = [1, 256], strides = [1, 1]} : vector<3x256xf32> to vector<1x256xf32>
    %13 = vector.broadcast %11 : vector<32x1xf32> to vector<32x256xf32>
    %14 = vector.broadcast %12 : vector<1x256xf32> to vector<32x256xf32>
    %15 = arith.mulf %13, %14 : vector<32x256xf32>
    %16 = arith.addf %10, %15 : vector<32x256xf32>
    %17 = vector.extract_strided_slice %2 {offsets = [0, 2], sizes = [32, 1], strides = [1, 1]} : vector<32x3xf32> to vector<32x1xf32>
    %18 = vector.extract_strided_slice %5 {offsets = [2, 0], sizes = [1, 256], strides = [1, 1]} : vector<3x256xf32> to vector<1x256xf32>
    %19 = vector.broadcast %17 : vector<32x1xf32> to vector<32x256xf32>
    %20 = vector.broadcast %18 : vector<1x256xf32> to vector<32x256xf32>
    %21 = arith.mulf %19, %20 : vector<32x256xf32>
    %22 = arith.addf %16, %21 : vector<32x256xf32>
    %23 = vector.broadcast %3 : vector<32x1xf32> to vector<32x256xf32>
    %24 = arith.addf %22, %23 : vector<32x256xf32>
    %cst_6 = arith.constant 0.000000e+00 : f32
    %25 = vector.broadcast %cst_6 : f32 to vector<32x256xf32>
    %26 = arith.cmpf oge, %24, %25 : vector<32x256xf32>
    %cst_7 = arith.constant 2.000000e-01 : f32
    %27 = vector.broadcast %cst_7 : f32 to vector<32x256xf32>
    %28 = arith.mulf %27, %24 : vector<32x256xf32>
    %29 = arith.select %26, %24, %28 : vector<32x256xi1>, vector<32x256xf32>
    %c0_8 = arith.constant 0 : index
    %c0_9 = arith.constant 0 : index
    %c0_10 = arith.constant 0 : index
    %30 = vector.load %arg5[%c0_8, %c0_9, %c0_10] : memref<2x32x256xf32, #tpu.memory_space<vmem>>, vector<1x32x256xf32>
    %31 = vector.shape_cast %30 : vector<1x32x256xf32> to vector<32x256xf32>
    %32 = vector.shape_cast %29 : vector<32x256xf32> to vector<1x32x256xf32>
    tpu.vector_store %arg5[%c0_8, %c0_9, %c0_10], %32 {strides = array<i32>} : memref<2x32x256xf32, #tpu.memory_space<vmem>>, vector<1x32x256xf32>,
    %c1 = arith.constant 1 : index
    %c0_11 = arith.constant 0 : index
    %c0_12 = arith.constant 0 : index
    %33 = vector.load %arg2[%c1, %c0_11, %c0_12] : memref<2x3x256xf32, #tpu.memory_space<vmem>>, vector<1x3x256xf32>
    %34 = vector.shape_cast %33 : vector<1x3x256xf32> to vector<3x256xf32>
    %35 = vector.extract_strided_slice %2 {offsets = [0, 0], sizes = [32, 1], strides = [1, 1]} : vector<32x3xf32> to vector<32x1xf32>
    %36 = vector.extract_strided_slice %34 {offsets = [0, 0], sizes = [1, 256], strides = [1, 1]} : vector<3x256xf32> to vector<1x256xf32>
    %37 = vector.broadcast %35 : vector<32x1xf32> to vector<32x256xf32>
    %38 = vector.broadcast %36 : vector<1x256xf32> to vector<32x256xf32>
    %39 = arith.mulf %37, %38 : vector<32x256xf32>
    %40 = vector.extract_strided_slice %2 {offsets = [0, 1], sizes = [32, 1], strides = [1, 1]} : vector<32x3xf32> to vector<32x1xf32>
    %41 = vector.extract_strided_slice %34 {offsets = [1, 0], sizes = [1, 256], strides = [1, 1]} : vector<3x256xf32> to vector<1x256xf32>
    %42 = vector.broadcast %40 : vector<32x1xf32> to vector<32x256xf32>
    %43 = vector.broadcast %41 : vector<1x256xf32> to vector<32x256xf32>
    %44 = arith.mulf %42, %43 : vector<32x256xf32>
    %45 = arith.addf %39, %44 : vector<32x256xf32>
    %46 = vector.extract_strided_slice %2 {offsets = [0, 2], sizes = [32, 1], strides = [1, 1]} : vector<32x3xf32> to vector<32x1xf32>
    %47 = vector.extract_strided_slice %34 {offsets = [2, 0], sizes = [1, 256], strides = [1, 1]} : vector<3x256xf32> to vector<1x256xf32>
    %48 = vector.broadcast %46 : vector<32x1xf32> to vector<32x256xf32>
    %49 = vector.broadcast %47 : vector<1x256xf32> to vector<32x256xf32>
    %50 = arith.mulf %48, %49 : vector<32x256xf32>
    %51 = arith.addf %45, %50 : vector<32x256xf32>
    %52 = vector.broadcast %3 : vector<32x1xf32> to vector<32x256xf32>
    %53 = arith.addf %51, %52 : vector<32x256xf32>
    %cst_13 = arith.constant 0.000000e+00 : f32
    %54 = vector.broadcast %cst_13 : f32 to vector<32x256xf32>
    %55 = arith.cmpf oge, %53, %54 : vector<32x256xf32>
    %cst_14 = arith.constant 2.000000e-01 : f32
    %56 = vector.broadcast %cst_14 : f32 to vector<32x256xf32>
    %57 = arith.mulf %56, %53 : vector<32x256xf32>
    %58 = arith.select %55, %53, %57 : vector<32x256xi1>, vector<32x256xf32>
    %c1_15 = arith.constant 1 : index
    %c0_16 = arith.constant 0 : index
    %c0_17 = arith.constant 0 : index
    %59 = vector.load %arg5[%c1_15, %c0_16, %c0_17] : memref<2x32x256xf32, #tpu.memory_space<vmem>>, vector<1x32x256xf32>
    %60 = vector.shape_cast %59 : vector<1x32x256xf32> to vector<32x256xf32>
    %61 = vector.shape_cast %58 : vector<32x256xf32> to vector<1x32x256xf32>
    tpu.vector_store %arg5[%c1_15, %c0_16, %c0_17], %61 {strides = array<i32>} : memref<2x32x256xf32, #tpu.memory_space<vmem>>, vector<1x32x256xf32>,
    return
  }
  func.func @transform_0(%arg0: i32, %arg1: i32) -> (i32, i32, i32) {
    %c0_i32 = arith.constant 0 : i32
    %c0_i32_0 = arith.constant 0 : i32
    return %arg0, %c0_i32, %arg1 : i32, i32, i32
  }
  func.func @transform_1(%arg0: i32, %arg1: i32) -> (i32, i32) {
    %c0_i32 = arith.constant 0 : i32
    %c0_i32_0 = arith.constant 0 : i32
    %c0_i32_1 = arith.constant 0 : i32
    return %c0_i32, %c0_i32_0 : i32, i32
  }
  func.func @transform_2(%arg0: i32, %arg1: i32) -> (i32, i32) {
    %c0_i32 = arith.constant 0 : i32
    %c0_i32_0 = arith.constant 0 : i32
    %c0_i32_1 = arith.constant 0 : i32
    return %c0_i32, %c0_i32_0 : i32, i32
  }
  func.func @transform_3(%arg0: i32, %arg1: i32) -> (i32, i32, i32) {
    %c0_i32 = arith.constant 0 : i32
    %c0_i32_0 = arith.constant 0 : i32
    return %arg0, %c0_i32, %arg1 : i32, i32, i32
  }
}

</mosaic_0001>

<llo_original>
// kernel: tpu_custom_call.1
$region0: #{tpu_custom_call.1}
  #allocation0 [shape = 'u32[]', space=smem, size = 0x4, offset = 0x4, fixed_abs, tag = 'smem constant byte address 0x4 - core index']
  #allocation1 [shape = 'u32[72,128]{1,0:T(1,128)}', space=vmem, size = 0x9000, scoped, tag = 'internal scratch']
  %s0 = inlined_call_operand.vmem [shape: f32[2,3,256], index: 0, kind: input, shape index: {}]
  %s1 = inlined_call_operand.vmem [shape: f32[32,3], index: 1, kind: input, shape index: {}]
  %s2 = inlined_call_operand.vmem [shape: f32[32,1], index: 2, kind: input, shape index: {}]
  %s3 = inlined_call_operand.hbm [shape: f32[2,32,256], index: 3, kind: output, shape index: {}]
  %s4 = sld [smem:[#allocation0]]
  $region22: #{tpu_custom_call.1} parent=0
    _
  %s6 = ssub.s32 1, %s4
  %s7 = scalar_select 0, %s6, %s4
  $region1: #{tpu_custom_call.1} parent=0
    #allocation2 [shape = 'u8[65536]{0}', space=vmem, size = 0x10000, scoped, tag = 'output window, operand 0, single buffered']
    #allocation3 [shape = 's32[1]{0}', space=sflag, size = 0x4, scoped, tag = 'scoped memory for tpu_custom_call.1']
    %8 = vsyncpa [#allocation3], 0
    // Predicated region
    $region2: #{tpu_custom_call.1} parent=1 // pred_check
      _
    $region3: #{tpu_custom_call.1} parent=1 // pred_check_branch
      %10 = sbr.rel (0) target = $region5
    $region4: #{tpu_custom_call.1} parent=1 // pred_region
      _
    $region5: #{tpu_custom_call.1} parent=1 // pred_fallthru
      _
    // Predicated region
    $region6: #{tpu_custom_call.1} parent=1 // pred_check
      _
    $region7: #{tpu_custom_call.1} parent=1 // pred_check_branch
      %12 = sbr.rel (0) target = $region9
    $region8: #{tpu_custom_call.1} parent=1 // pred_region
      _
    $region9: #{tpu_custom_call.1} parent=1 // pred_fallthru
      _
    // Predicated region
    $region10: #{tpu_custom_call.1} parent=1 // pred_check
      _
    $region11: #{tpu_custom_call.1} parent=1 // pred_check_branch
      %14 = sbr.rel (0) target = $region13
    $region12: #{tpu_custom_call.1} parent=1 // pred_region
      _
    $region13: #{tpu_custom_call.1} parent=1 // pred_fallthru
      _
    %v15 = vld [vmem:[%s1] sm:$0xff]
    %v16 = vld [vmem:[%s1 + $0x8] sm:$0xff]
    %v17 = vld [vmem:[%s1 + $0x10] sm:$0xff]
    %v18 = vld [vmem:[%s1 + $0x18] sm:$0xff]
    %v19 = vmul.f32 %v15, 0.8164966
    %v20 = vmul.f32 %v16, 0.8164966
    %v21 = vmul.f32 %v17, 0.8164966
    %v22 = vmul.f32 %v18, 0.8164966
    %v23 = vld [vmem:[%s2] sm:$0xff]
    %v24 = vld [vmem:[%s2 + $0x8] sm:$0xff]
    %v25 = vld [vmem:[%s2 + $0x10] sm:$0xff]
    %v26 = vld [vmem:[%s2 + $0x18] sm:$0xff]
    %v27 = vld [vmem:[%s0] sm:$0x77]
    %29 = vset.pattern.permute.xlu0 0
    %30 = vperm.xlu0 %29, %v19
    %v31 = vpop.permute.xlu0 %30
    %34 = vset.pattern.permute.xlu0 0
    %35 = vperm.xlu0 %34, %v20
    %v36 = vpop.permute.xlu0 %35
    %39 = vset.pattern.permute.xlu0 0
    %40 = vperm.xlu0 %39, %v21
    %v41 = vpop.permute.xlu0 %40
    %44 = vset.pattern.permute.xlu0 0
    %45 = vperm.xlu0 %44, %v22
    %v46 = vpop.permute.xlu0 %45
    %v49 = vperm.slane %v27, 0
    %v50 = vperm.slane %v27, 4
    %v53 = vperm.slane %v49, 0
    %v54 = vperm.slane %v50, 0
    %v55 = vmul.f32 %v31, %v53
    %v56 = vmul.f32 %v31, %v54
    %v57 = vmul.f32 %v36, %v53
    %v58 = vmul.f32 %v36, %v54
    %v59 = vmul.f32 %v41, %v53
    %v60 = vmul.f32 %v41, %v54
    %v61 = vmul.f32 %v46, %v53
    %v62 = vmul.f32 %v46, %v54
    %63 = vset.pattern.permute.xlu0 1
    %64 = vperm.xlu0 %63, %v19
    %v65 = vpop.permute.xlu0 %64
    %67 = vset.pattern.permute.xlu0 1
    %68 = vperm.xlu0 %67, %v20
    %v69 = vpop.permute.xlu0 %68
    %71 = vset.pattern.permute.xlu0 1
    %72 = vperm.xlu0 %71, %v21
    %v73 = vpop.permute.xlu0 %72
    %75 = vset.pattern.permute.xlu0 1
    %76 = vperm.xlu0 %75, %v22
    %v77 = vpop.permute.xlu0 %76
    %v79 = vperm.slane %v27, 1
    %v80 = vperm.slane %v27, 5
    %v83 = vperm.slane %v79, 1
    %v84 = vperm.slane %v80, 1
    %v85 = vmul.f32 %v65, %v83
    %v86 = vmul.f32 %v65, %v84
    %v87 = vmul.f32 %v69, %v83
    %v88 = vmul.f32 %v69, %v84
    %v89 = vmul.f32 %v73, %v83
    %v90 = vmul.f32 %v73, %v84
    %v91 = vmul.f32 %v77, %v83
    %v92 = vmul.f32 %v77, %v84
    %v93 = vadd.f32 %v55, %v85
    %v94 = vadd.f32 %v56, %v86
    %v95 = vadd.f32 %v57, %v87
    %v96 = vadd.f32 %v58, %v88
    %v97 = vadd.f32 %v59, %v89
    %v98 = vadd.f32 %v60, %v90
    %v99 = vadd.f32 %v61, %v91
    %v100 = vadd.f32 %v62, %v92
    %101 = vset.pattern.permute.xlu0 2
    %102 = vperm.xlu0 %101, %v19
    %v103 = vpop.permute.xlu0 %102
    %105 = vset.pattern.permute.xlu0 2
    %106 = vperm.xlu0 %105, %v20
    %v107 = vpop.permute.xlu0 %106
    %109 = vset.pattern.permute.xlu0 2
    %110 = vperm.xlu0 %109, %v21
    %v111 = vpop.permute.xlu0 %110
    %113 = vset.pattern.permute.xlu0 2
    %114 = vperm.xlu0 %113, %v22
    %v115 = vpop.permute.xlu0 %114
    %v117 = vperm.slane %v27, 2
    %v118 = vperm.slane %v27, 6
    %v121 = vperm.slane %v117, 2
    %v122 = vperm.slane %v118, 2
    %v123 = vmul.f32 %v103, %v121
    %v124 = vmul.f32 %v103, %v122
    %v125 = vmul.f32 %v107, %v121
    %v126 = vmul.f32 %v107, %v122
    %v127 = vmul.f32 %v111, %v121
    %v128 = vmul.f32 %v111, %v122
    %v129 = vmul.f32 %v115, %v121
    %v130 = vmul.f32 %v115, %v122
    %v131 = vadd.f32 %v93, %v123
    %v132 = vadd.f32 %v94, %v124
    %v133 = vadd.f32 %v95, %v125
    %v134 = vadd.f32 %v96, %v126
    %v135 = vadd.f32 %v97, %v127
    %v136 = vadd.f32 %v98, %v128
    %v137 = vadd.f32 %v99, %v129
    %v138 = vadd.f32 %v100, %v130
    %140 = vset.pattern.permute.xlu0 0
    %141 = vperm.xlu0 %140, %v23
    %v142 = vpop.permute.xlu0 %141
    %145 = vset.pattern.permute.xlu0 0
    %146 = vperm.xlu0 %145, %v24
    %v147 = vpop.permute.xlu0 %146
    %150 = vset.pattern.permute.xlu0 0
    %151 = vperm.xlu0 %150, %v25
    %v152 = vpop.permute.xlu0 %151
    %155 = vset.pattern.permute.xlu0 0
    %156 = vperm.xlu0 %155, %v26
    %v157 = vpop.permute.xlu0 %156
    %v159 = vadd.f32 %v131, %v142
    %v160 = vadd.f32 %v132, %v142
    %v161 = vadd.f32 %v133, %v147
    %v162 = vadd.f32 %v134, %v147
    %v163 = vadd.f32 %v135, %v152
    %v164 = vadd.f32 %v136, %v152
    %v165 = vadd.f32 %v137, %v157
    %v166 = vadd.f32 %v138, %v157
    %vm167 = vcmp.ge.f32.partialorder %v159, 0.0
    %vm168 = vcmp.ge.f32.partialorder %v160, 0.0
    %vm169 = vcmp.ge.f32.partialorder %v161, 0.0
    %vm170 = vcmp.ge.f32.partialorder %v162, 0.0
    %vm171 = vcmp.ge.f32.partialorder %v163, 0.0
    %vm172 = vcmp.ge.f32.partialorder %v164, 0.0
    %vm173 = vcmp.ge.f32.partialorder %v165, 0.0
    %vm174 = vcmp.ge.f32.partialorder %v166, 0.0
    %v175 = vmul.f32 %v159, 0.2
    %v176 = vmul.f32 %v160, 0.2
    %v177 = vmul.f32 %v161, 0.2
    %v178 = vmul.f32 %v162, 0.2
    %v179 = vmul.f32 %v163, 0.2
    %v180 = vmul.f32 %v164, 0.2
    %v181 = vmul.f32 %v165, 0.2
    %v182 = vmul.f32 %v166, 0.2
    %v183 = vsel %vm167, %v159, %v175
    %v184 = vsel %vm168, %v160, %v176
    %v185 = vsel %vm169, %v161, %v177
    %v186 = vsel %vm170, %v162, %v178
    %v187 = vsel %vm171, %v163, %v179
    %v188 = vsel %vm172, %v164, %v180
    %v189 = vsel %vm173, %v165, %v181
    %v190 = vsel %vm174, %v166, %v182
    %191 = vst [vmem:[#allocation2] sm:$0xff] %v183
    %192 = vst [vmem:[#allocation2 + $0x8] sm:$0xff] %v184
    %193 = vst [vmem:[#allocation2 + $0x10] sm:$0xff] %v185
    %194 = vst [vmem:[#allocation2 + $0x18] sm:$0xff] %v186
    %195 = vst [vmem:[#allocation2 + $0x20] sm:$0xff] %v187
    %196 = vst [vmem:[#allocation2 + $0x28] sm:$0xff] %v188
    %197 = vst [vmem:[#allocation2 + $0x30] sm:$0xff] %v189
    %198 = vst [vmem:[#allocation2 + $0x38] sm:$0xff] %v190
    %s199 = scalar_lea.vmem %s0, 8
    %v200 = vld [vmem:[%s199] sm:$0x77]
    %v202 = vperm.slane %v200, 0
    %v203 = vperm.slane %v200, 4
    %v206 = vperm.slane %v202, 0
    %v207 = vperm.slane %v203, 0
    %v208 = vmul.f32 %v31, %v206
    %v209 = vmul.f32 %v31, %v207
    %v210 = vmul.f32 %v36, %v206
    %v211 = vmul.f32 %v36, %v207
    %v212 = vmul.f32 %v41, %v206
    %v213 = vmul.f32 %v41, %v207
    %v214 = vmul.f32 %v46, %v206
    %v215 = vmul.f32 %v46, %v207
    %v216 = vperm.slane %v200, 1
    %v217 = vperm.slane %v200, 5
    %v220 = vperm.slane %v216, 1
    %v221 = vperm.slane %v217, 1
    %v222 = vmul.f32 %v65, %v220
    %v223 = vmul.f32 %v65, %v221
    %v224 = vmul.f32 %v69, %v220
    %v225 = vmul.f32 %v69, %v221
    %v226 = vmul.f32 %v73, %v220
    %v227 = vmul.f32 %v73, %v221
    %v228 = vmul.f32 %v77, %v220
    %v229 = vmul.f32 %v77, %v221
    %v230 = vadd.f32 %v208, %v222
    %v231 = vadd.f32 %v209, %v223
    %v232 = vadd.f32 %v210, %v224
    %v233 = vadd.f32 %v211, %v225
    %v234 = vadd.f32 %v212, %v226
    %v235 = vadd.f32 %v213, %v227
    %v236 = vadd.f32 %v214, %v228
    %v237 = vadd.f32 %v215, %v229
    %v238 = vperm.slane %v200, 2
    %v239 = vperm.slane %v200, 6
    %v242 = vperm.slane %v238, 2
    %v243 = vperm.slane %v239, 2
    %v244 = vmul.f32 %v103, %v242
    %v245 = vmul.f32 %v103, %v243
    %v246 = vmul.f32 %v107, %v242
    %v247 = vmul.f32 %v107, %v243
    %v248 = vmul.f32 %v111, %v242
    %v249 = vmul.f32 %v111, %v243
    %v250 = vmul.f32 %v115, %v242
    %v251 = vmul.f32 %v115, %v243
    %v252 = vadd.f32 %v230, %v244
    %v253 = vadd.f32 %v231, %v245
    %v254 = vadd.f32 %v232, %v246
    %v255 = vadd.f32 %v233, %v247
    %v256 = vadd.f32 %v234, %v248
    %v257 = vadd.f32 %v235, %v249
    %v258 = vadd.f32 %v236, %v250
    %v259 = vadd.f32 %v237, %v251
    %v260 = vadd.f32 %v252, %v142
    %v261 = vadd.f32 %v253, %v142
    %v262 = vadd.f32 %v254, %v147
    %v263 = vadd.f32 %v255, %v147
    %v264 = vadd.f32 %v256, %v152
    %v265 = vadd.f32 %v257, %v152
    %v266 = vadd.f32 %v258, %v157
    %v267 = vadd.f32 %v259, %v157
    %vm268 = vcmp.ge.f32.partialorder %v260, 0.0
    %vm269 = vcmp.ge.f32.partialorder %v261, 0.0
    %vm270 = vcmp.ge.f32.partialorder %v262, 0.0
    %vm271 = vcmp.ge.f32.partialorder %v263, 0.0
    %vm272 = vcmp.ge.f32.partialorder %v264, 0.0
    %vm273 = vcmp.ge.f32.partialorder %v265, 0.0
    %vm274 = vcmp.ge.f32.partialorder %v266, 0.0
    %vm275 = vcmp.ge.f32.partialorder %v267, 0.0
    %v276 = vmul.f32 %v260, 0.2
    %v277 = vmul.f32 %v261, 0.2
    %v278 = vmul.f32 %v262, 0.2
    %v279 = vmul.f32 %v263, 0.2
    %v280 = vmul.f32 %v264, 0.2
    %v281 = vmul.f32 %v265, 0.2
    %v282 = vmul.f32 %v266, 0.2
    %v283 = vmul.f32 %v267, 0.2
    %v284 = vsel %vm268, %v260, %v276
    %v285 = vsel %vm269, %v261, %v277
    %v286 = vsel %vm270, %v262, %v278
    %v287 = vsel %vm271, %v263, %v279
    %v288 = vsel %vm272, %v264, %v280
    %v289 = vsel %vm273, %v265, %v281
    %v290 = vsel %vm274, %v266, %v282
    %v291 = vsel %vm275, %v267, %v283
    %s292 = scalar_lea.vmem [#allocation2], 64
    %293 = vst [vmem:[%s292] sm:$0xff] %v284
    %294 = vst [vmem:[%s292 + $0x8] sm:$0xff] %v285
    %295 = vst [vmem:[%s292 + $0x10] sm:$0xff] %v286
    %296 = vst [vmem:[%s292 + $0x18] sm:$0xff] %v287
    %297 = vst [vmem:[%s292 + $0x20] sm:$0xff] %v288
    %298 = vst [vmem:[%s292 + $0x28] sm:$0xff] %v289
    %299 = vst [vmem:[%s292 + $0x30] sm:$0xff] %v290
    %300 = vst [vmem:[%s292 + $0x38] sm:$0xff] %v291
    // Predicated region
    $region14: #{tpu_custom_call.1} parent=1 // pred_check
      _
    $region15: #{tpu_custom_call.1} parent=1 // pred_check_branch
      %302 = sbr.rel (0) target = $region17
    $region16: #{tpu_custom_call.1} parent=1 // pred_region
      %304 = vsyncadd [#allocation3], 0
      %s305 = sshll.u32 [#allocation2], 4
      %s306 = int_to_ptr.vmem [resolvable:$true] %s305
      %s307 = sshll.u32 %s3, 4
      %s308 = int_to_ptr.hbm [resolvable:$true] %s307
      %313 = dma.vmem_to_hbm [thread:$0]  %s306, 2048, %s308, [#allocation3], 256, 256, 16
    $region17: #{tpu_custom_call.1} parent=1 // pred_fallthru
      _
    // Predicated region
    $region18: #{tpu_custom_call.1} parent=1 // pred_check
      _
    $region19: #{tpu_custom_call.1} parent=1 // pred_check_branch
      %315 = sbr.rel (0) target = $region21
    $region20: #{tpu_custom_call.1} parent=1 // pred_region
      %317 = dma.done [#allocation3], 2048
    $region21: #{tpu_custom_call.1} parent=1 // pred_fallthru
      _
    %318 = vsyncpa [#allocation3], 1

</llo_original>
